<compile_context>
chip_gen: v7x
topology: tpu7x:2x2x1
jax: 0.10.0
libtpu: 0.0.40
codegen_flags: <defaults>
</compile_context>

<pallas_src>
import jax
import jax.numpy as jnp
import numpy as np
from jax.experimental import pallas as pl
from jax.experimental.pallas import tpu as pltpu


def _cls_concat_kernel(cls_ref, type_ref, x1_ref, x2_ref, o_ref):
    # Block shapes (per grid step):
    #   cls_ref : (1, 1, E)     shared cls token
    #   type_ref: (2, E)        type-embedding table
    #   x1_ref  : (TB, S1, E)
    #   x2_ref  : (TB, S2, E)
    #   o_ref   : (TB, 1 + S1 + S2, E)
    s1 = x1_ref.shape[1]
    s2 = x2_ref.shape[1]

    # Row 0 of every batch row in the tile: the cls token, broadcast over TB.
    o_ref[:, 0:1, :] = jnp.broadcast_to(cls_ref[...], o_ref[:, 0:1, :].shape)

    # Rows 1 .. S1: x1 + type-0 embedding, broadcast over (TB, S1).
    t0 = type_ref[0:1, :][None, :, :]           # (1, 1, E)
    o_ref[:, 1:1 + s1, :] = x1_ref[...] + t0

    # Rows S1+1 .. S1+S2: x2 + type-1 embedding.
    t1 = type_ref[1:2, :][None, :, :]           # (1, 1, E)
    o_ref[:, 1 + s1:1 + s1 + s2, :] = x2_ref[...] + t1


def _pick_batch_tile(B, S1, S2, E, itemsize, vmem_budget_bytes=8 << 20):
    """Largest divisor of B whose double-buffered working set fits the budget."""
    T = 1 + S1 + S2
    per_row = (S1 + S2 + T) * E * itemsize * 2   # inputs + output, double-buffered
    cap = max(1, vmem_budget_bytes // max(per_row, 1))
    tb = 1
    for d in range(1, B + 1):
        if B % d == 0 and d <= cap:
            tb = d
    return tb


def model_with_cls_token_forward(x1, x2, cls_token, type_table):
    B, S1, E = x1.shape
    B2, S2, E2 = x2.shape
    assert B == B2 and E == E2, "x1 / x2 must share batch and embed dims"
    T = 1 + S1 + S2
    TB = _pick_batch_tile(B, S1, S2, E, jnp.dtype(x1.dtype).itemsize)

    return pl.pallas_call(
        _cls_concat_kernel,
        out_shape=jax.ShapeDtypeStruct((B, T, E), x1.dtype),
        grid=(B // TB,),
        in_specs=[
            pl.BlockSpec((1, 1, E), lambda b: (0, 0, 0)),     # cls token (resident)
            pl.BlockSpec((2, E), lambda b: (0, 0)),           # type table (resident)
            pl.BlockSpec((TB, S1, E), lambda b: (b, 0, 0)),   # x1, TB batch rows
            pl.BlockSpec((TB, S2, E), lambda b: (b, 0, 0)),   # x2, TB batch rows
        ],
        out_specs=pl.BlockSpec((TB, T, E), lambda b: (b, 0, 0)),
        compiler_params=pltpu.CompilerParams(
            dimension_semantics=("parallel",)),
    )(cls_token, type_table, x1, x2)


# ----------------------------------------------------------------------------
# Pure-JAX reference (correctness check only)
# ----------------------------------------------------------------------------
def reference(x1, x2, cls_token, type_table):
    B = x1.shape[0]
    cls = jnp.broadcast_to(cls_token, (B, 1, cls_token.shape[-1]))
    x1t = x1 + type_table[0][None, None, :]
    x2t = x2 + type_table[1][None, None, :]
    return jnp.concatenate([cls, x1t, x2t], axis=1)


if __name__ == "__main__":
    key = jax.random.PRNGKey(0)
    k1, k2, k3 = jax.random.split(key, 3)

    # Small shapes consistent with the module: batch=2, seq=8 per input,
    # embed_dim=128 (lane-dense last dim).
    B, S1, S2, E = 2, 8, 8, 128
    x1 = jax.random.normal(k1, (B, S1, E), dtype=jnp.float32)
    x2 = jax.random.normal(k2, (B, S2, E), dtype=jnp.float32)

    # Parameters matching the PyTorch module:
    #   cls_token = ones(1,1,E) * 0.01 ; type_embeddings.weight ~ N(0,1), shape (2, E)
    cls_token = jnp.full((1, 1, E), 0.01, dtype=jnp.float32)
    type_table = jax.random.normal(k3, (2, E), dtype=jnp.float32)

    fwd = jax.jit(model_with_cls_token_forward)
    out = jax.block_until_ready(fwd(x1, x2, cls_token, type_table))

    ref = reference(x1, x2, cls_token, type_table)
    np.testing.assert_allclose(np.asarray(out), np.asarray(ref), atol=1e-6, rtol=1e-6)
    assert out.shape == (B, 1 + S1 + S2, E)

    print("KERNEL_OK")
</pallas_src>

<mosaic_0001>
module attributes {stable_mosaic.version = 11 : i64} {
  func.func @_cls_concat_kernel(%arg0: i32, %arg1: memref<1x1x128xf32, #tpu.memory_space<vmem>>, %arg2: memref<2x128xf32, #tpu.memory_space<vmem>>, %arg3: memref<2x8x128xf32, #tpu.memory_space<vmem>>, %arg4: memref<2x8x128xf32, #tpu.memory_space<vmem>>, %arg5: memref<2x17x128xf32, #tpu.memory_space<vmem>>) attributes {dimension_semantics = [#tpu.dimension_semantics<parallel>], iteration_bounds = array<i64: 1>, scalar_prefetch = 0 : i64, scratch_operands = 0 : i64, tpu.core_type = #tpu.core_type<tc>, window_params = [{pipeline_mode = #tpu.pipeline_mode<synchronous>, transform_indices = @transform_0, window_bounds = array<i64: 1, 1, 128>}, {pipeline_mode = #tpu.pipeline_mode<synchronous>, transform_indices = @transform_1, window_bounds = array<i64: 2, 128>}, {transform_indices = @transform_2, window_bounds = array<i64: 2, 8, 128>}, {transform_indices = @transform_3, window_bounds = array<i64: 2, 8, 128>}, {transform_indices = @transform_4, window_bounds = array<i64: 2, 17, 128>}]} {
    %c0 = arith.constant 0 : index
    %c0_0 = arith.constant 0 : index
    %c0_1 = arith.constant 0 : index
    %0 = vector.load %arg1[%c0, %c0_0, %c0_1] : memref<1x1x128xf32, #tpu.memory_space<vmem>>, vector<1x1x128xf32>
    %1 = vector.shape_cast %0 : vector<1x1x128xf32> to vector<1x1x128xf32>
    %2 = vector.broadcast %1 : vector<1x1x128xf32> to vector<2x1x128xf32>
    %c0_2 = arith.constant 0 : index
    %c0_3 = arith.constant 0 : index
    %c0_4 = arith.constant 0 : index
    %3 = vector.load %arg5[%c0_2, %c0_3, %c0_4] : memref<2x17x128xf32, #tpu.memory_space<vmem>>, vector<2x1x128xf32>
    tpu.vector_store %arg5[%c0_2, %c0_3, %c0_4], %2 {strides = array<i32>} : memref<2x17x128xf32, #tpu.memory_space<vmem>>, vector<2x1x128xf32>,
    %c0_5 = arith.constant 0 : index
    %c0_6 = arith.constant 0 : index
    %4 = vector.load %arg2[%c0_5, %c0_6] : memref<2x128xf32, #tpu.memory_space<vmem>>, vector<1x128xf32>
    %5 = vector.shape_cast %4 : vector<1x128xf32> to vector<1x1x128xf32>
    %c0_7 = arith.constant 0 : index
    %c0_8 = arith.constant 0 : index
    %c0_9 = arith.constant 0 : index
    %6 = vector.load %arg3[%c0_7, %c0_8, %c0_9] : memref<2x8x128xf32, #tpu.memory_space<vmem>>, vector<2x8x128xf32>
    %7 = vector.broadcast %5 : vector<1x1x128xf32> to vector<2x8x128xf32>
    %8 = arith.addf %6, %7 : vector<2x8x128xf32>
    %c0_10 = arith.constant 0 : index
    %c1 = arith.constant 1 : index
    %c0_11 = arith.constant 0 : index
    %9 = vector.load %arg5[%c0_10, %c1, %c0_11] : memref<2x17x128xf32, #tpu.memory_space<vmem>>, vector<2x8x128xf32>
    tpu.vector_store %arg5[%c0_10, %c1, %c0_11], %8 {strides = array<i32>} : memref<2x17x128xf32, #tpu.memory_space<vmem>>, vector<2x8x128xf32>,
    %c1_12 = arith.constant 1 : index
    %c0_13 = arith.constant 0 : index
    %10 = vector.load %arg2[%c1_12, %c0_13] : memref<2x128xf32, #tpu.memory_space<vmem>>, vector<1x128xf32>
    %11 = vector.shape_cast %10 : vector<1x128xf32> to vector<1x1x128xf32>
    %c0_14 = arith.constant 0 : index
    %c0_15 = arith.constant 0 : index
    %c0_16 = arith.constant 0 : index
    %12 = vector.load %arg4[%c0_14, %c0_15, %c0_16] : memref<2x8x128xf32, #tpu.memory_space<vmem>>, vector<2x8x128xf32>
    %13 = vector.broadcast %11 : vector<1x1x128xf32> to vector<2x8x128xf32>
    %14 = arith.addf %12, %13 : vector<2x8x128xf32>
    %c0_17 = arith.constant 0 : index
    %c9 = arith.constant 9 : index
    %c0_18 = arith.constant 0 : index
    %15 = vector.load %arg5[%c0_17, %c9, %c0_18] : memref<2x17x128xf32, #tpu.memory_space<vmem>>, vector<2x8x128xf32>
    tpu.vector_store %arg5[%c0_17, %c9, %c0_18], %14 {strides = array<i32>} : memref<2x17x128xf32, #tpu.memory_space<vmem>>, vector<2x8x128xf32>,
    return
  }
  func.func @transform_0(%arg0: i32) -> (i32, i32, i32) {
    %c0_i32 = arith.constant 0 : i32
    %c0_i32_0 = arith.constant 0 : i32
    %c0_i32_1 = arith.constant 0 : i32
    %c0_i32_2 = arith.constant 0 : i32
    return %c0_i32, %c0_i32_0, %c0_i32_1 : i32, i32, i32
  }
  func.func @transform_1(%arg0: i32) -> (i32, i32) {
    %c0_i32 = arith.constant 0 : i32
    %c0_i32_0 = arith.constant 0 : i32
    %c0_i32_1 = arith.constant 0 : i32
    return %c0_i32, %c0_i32_0 : i32, i32
  }
  func.func @transform_2(%arg0: i32) -> (i32, i32, i32) {
    %c0_i32 = arith.constant 0 : i32
    %c0_i32_0 = arith.constant 0 : i32
    %c0_i32_1 = arith.constant 0 : i32
    return %arg0, %c0_i32, %c0_i32_0 : i32, i32, i32
  }
  func.func @transform_3(%arg0: i32) -> (i32, i32, i32) {
    %c0_i32 = arith.constant 0 : i32
    %c0_i32_0 = arith.constant 0 : i32
    %c0_i32_1 = arith.constant 0 : i32
    return %arg0, %c0_i32, %c0_i32_0 : i32, i32, i32
  }
  func.func @transform_4(%arg0: i32) -> (i32, i32, i32) {
    %c0_i32 = arith.constant 0 : i32
    %c0_i32_0 = arith.constant 0 : i32
    %c0_i32_1 = arith.constant 0 : i32
    return %arg0, %c0_i32, %c0_i32_0 : i32, i32, i32
  }
}

</mosaic_0001>

<llo_original>
// kernel: model_with_cls_token_forward.1
$region0: #{model_with_cls_token_forward.1}
  #allocation0 [shape = 'u32[]', space=smem, size = 0x4, offset = 0x4, fixed_abs, tag = 'smem constant byte address 0x4 - core index']
  #allocation1 [shape = 'u32[144,128]{1,0:T(1,128)}', space=vmem, size = 0x12000, scoped, tag = 'internal scratch']
  %s0 = inlined_call_operand.vmem [shape: f32[1,1,128], index: 0, kind: input, shape index: {}]
  %s1 = inlined_call_operand.vmem [shape: f32[2,128], index: 1, kind: input, shape index: {}]
  %s2 = inlined_call_operand.hbm [shape: f32[2,8,128], index: 2, kind: input, shape index: {}]
  %s3 = inlined_call_operand.hbm [shape: f32[2,8,128], index: 3, kind: input, shape index: {}]
  %s4 = inlined_call_operand.vmem [shape: f32[2,17,128], index: 4, kind: output, shape index: {}]
  %s5 = sld [smem:[#allocation0]]
  $region34: #{model_with_cls_token_forward.1} parent=0
    _
  %s7 = ssub.s32 1, %s5
  %s8 = scalar_select 0, %s7, %s5
  $region1: #{model_with_cls_token_forward.1} parent=0
    #allocation2 [shape = 'u8[8192]{0}', space=vmem, size = 0x2000, scoped, tag = 'input window, operand 2, single buffered']
    #allocation3 [shape = 's32[1]{0}', space=sflag, size = 0x4, scoped, tag = 'scoped memory for model_with_cls_token_forward.1']
    #allocation4 [shape = 'u8[8192]{0}', space=vmem, size = 0x2000, scoped, tag = 'input window, operand 3, single buffered']
    #allocation5 [shape = 's32[1]{0}', space=sflag, size = 0x4, scoped, tag = 'scoped memory for model_with_cls_token_forward.1']
    %9 = vsyncpa [#allocation3], 0
    %10 = vsyncpa [#allocation5], 0
    // Predicated region
    $region2: #{model_with_cls_token_forward.1} parent=1 // pred_check
      _
    $region3: #{model_with_cls_token_forward.1} parent=1 // pred_check_branch
      %12 = sbr.rel (0) target = $region5
    $region4: #{model_with_cls_token_forward.1} parent=1 // pred_region
      _
    $region5: #{model_with_cls_token_forward.1} parent=1 // pred_fallthru
      _
    // Predicated region
    $region6: #{model_with_cls_token_forward.1} parent=1 // pred_check
      _
    $region7: #{model_with_cls_token_forward.1} parent=1 // pred_check_branch
      %14 = sbr.rel (0) target = $region9
    $region8: #{model_with_cls_token_forward.1} parent=1 // pred_region
      _
    $region9: #{model_with_cls_token_forward.1} parent=1 // pred_fallthru
      _
    // Predicated region
    $region10: #{model_with_cls_token_forward.1} parent=1 // pred_check
      _
    $region11: #{model_with_cls_token_forward.1} parent=1 // pred_check_branch
      %16 = sbr.rel (0) target = $region13
    $region12: #{model_with_cls_token_forward.1} parent=1 // pred_region
      %s18 = ssub.s32 256, 256
      %19 = vsyncadd [#allocation3], %s18
      %s20 = sshll.u32 [#allocation2], 4
      %s21 = int_to_ptr.vmem [resolvable:$true] %s20
      %26 = dma.hbm_to_vmem [thread:$0]  %s2, 256, %s21, [#allocation3], 128, 128, 8
    $region13: #{model_with_cls_token_forward.1} parent=1 // pred_fallthru
      _
    // Predicated region
    $region14: #{model_with_cls_token_forward.1} parent=1 // pred_check
      _
    $region15: #{model_with_cls_token_forward.1} parent=1 // pred_check_branch
      %28 = sbr.rel (0) target = $region17
    $region16: #{model_with_cls_token_forward.1} parent=1 // pred_region
      %s30 = ssub.s32 256, 256
      %31 = vsyncadd [#allocation5], %s30
      %s32 = sshll.u32 [#allocation4], 4
      %s33 = int_to_ptr.vmem [resolvable:$true] %s32
      %38 = dma.hbm_to_vmem [thread:$0]  %s3, 256, %s33, [#allocation5], 128, 128, 8
    $region17: #{model_with_cls_token_forward.1} parent=1 // pred_fallthru
      _
    // Predicated region
    $region18: #{model_with_cls_token_forward.1} parent=1 // pred_check
      _
    $region19: #{model_with_cls_token_forward.1} parent=1 // pred_check_branch
      %40 = sbr.rel (0) target = $region21
    $region20: #{model_with_cls_token_forward.1} parent=1 // pred_region
      %41 = dma.done [#allocation3], 256
    $region21: #{model_with_cls_token_forward.1} parent=1 // pred_fallthru
      _
    // Predicated region
    $region22: #{model_with_cls_token_forward.1} parent=1 // pred_check
      _
    $region23: #{model_with_cls_token_forward.1} parent=1 // pred_check_branch
      %43 = sbr.rel (0) target = $region25
    $region24: #{model_with_cls_token_forward.1} parent=1 // pred_region
      %44 = dma.done [#allocation5], 256
    $region25: #{model_with_cls_token_forward.1} parent=1 // pred_fallthru
      _
    %v45 = vld [vmem:[%s0] sm:$0x1]
    %46 = vst [vmem:[%s4] sm:$0x1] %v45
    %47 = vst [vmem:[%s4 + $0x18] sm:$0x1] %v45
    %v48 = vld [vmem:[%s1] sm:$0x1]
    %v49 = vld [vmem:[#allocation2] sm:$0xff]
    %v50 = vld [vmem:[#allocation2 + $0x8] sm:$0xff]
    %v51 = vlaneseq
    %v52 = vshrl.u32 %v51, 7
    %v53 = vsub.s32 0, %v52
    %v54 = vrot.slane %v48, %v53
    %v55 = vadd.f32 %v49, %v54
    %v56 = vadd.f32 %v50, %v54
    %57 = vst [vmem:[%s4 + $0x1] sm:$0xff] %v55
    %58 = vst [vmem:[%s4 + $0x19] sm:$0xff] %v56
    %v59 = vld [vmem:[%s1 + $0x1] sm:$0x1]
    %v60 = vld [vmem:[#allocation4] sm:$0xff]
    %v61 = vld [vmem:[#allocation4 + $0x8] sm:$0xff]
    %v62 = vlaneseq
    %v63 = vshrl.u32 %v62, 7
    %v64 = vsub.s32 0, %v63
    %v65 = vrot.slane %v59, %v64
    %v66 = vadd.f32 %v60, %v65
    %v67 = vadd.f32 %v61, %v65
    %68 = vst [vmem:[%s4 + $0x9] sm:$0xff] %v66
    %69 = vst [vmem:[%s4 + $0x21] sm:$0xff] %v67
    // Predicated region
    $region26: #{model_with_cls_token_forward.1} parent=1 // pred_check
      _
    $region27: #{model_with_cls_token_forward.1} parent=1 // pred_check_branch
      %71 = sbr.rel (0) target = $region29
    $region28: #{model_with_cls_token_forward.1} parent=1 // pred_region
      _
    $region29: #{model_with_cls_token_forward.1} parent=1 // pred_fallthru
      _
    // Predicated region
    $region30: #{model_with_cls_token_forward.1} parent=1 // pred_check
      _
    $region31: #{model_with_cls_token_forward.1} parent=1 // pred_check_branch
      %73 = sbr.rel (0) target = $region33
    $region32: #{model_with_cls_token_forward.1} parent=1 // pred_region
      _
    $region33: #{model_with_cls_token_forward.1} parent=1 // pred_fallthru
      _
    %74 = vsyncpa [#allocation3], 1
    %75 = vsyncpa [#allocation5], 1

</llo_original>
